<compile_context>
chip_gen: v5e
topology: v5e:2x2
jax: 0.10.0
libtpu: 0.0.40
codegen_flags: <defaults>
</compile_context>

<pallas_src>
import functools

import jax
import jax.numpy as jnp
from jax.experimental import pallas as pl
from jax.experimental.pallas import tpu as pltpu


def _nce_softmax_loss_kernel(x_ref, o_ref, m_sc, s_sc, x0_sc, *,
                             bsz, k, tb, tk, mask_rows, mask_cols):
    i = pl.program_id(0)
    j = pl.program_id(1)
    nk = pl.num_programs(1)

    # Native-dtype DMA; cast to f32 for the reduction / exp.
    # TODO(synk): on v7x with bf16 inputs the single EUP can become the binding
    # unit at 3.2 TB/s; if the bundle dump shows the EUP slot saturated, do the
    # (x - m)/exp in bf16 (v6e/v7x EUP has a bf16 path) and keep only the
    # accumulation/log in f32. Not applied unconditionally: v5e has no bf16 EUP.
    x = x_ref[...].astype(jnp.float32)                       # [tb, tk]

    if mask_cols:
        # Padded K columns of the last K block -> -inf (contribute 0 to exp-sum).
        col_ids = j * tk + jax.lax.broadcasted_iota(jnp.int32, (tb, tk), 1)
        x = jnp.where(col_ids < k, x, -jnp.inf)

    @pl.when(j == 0)
    def _():
        m_sc[...] = jnp.full_like(m_sc, -jnp.inf)
        s_sc[...] = jnp.zeros_like(s_sc)
        x0_sc[...] = x[:, 0:1]                               # label-0 logit (col 0)

    # Online (streaming) logsumexp over the K axis.
    m_prev = m_sc[...]
    m_new = jnp.maximum(m_prev, jnp.max(x, axis=-1, keepdims=True))
    s_sc[...] = (s_sc[...] * jnp.exp(m_prev - m_new)
                 + jnp.sum(jnp.exp(x - m_new), axis=-1, keepdims=True))
    m_sc[...] = m_new

    @pl.when(j == nk - 1)
    def _():
        lse = m_sc[...] + jnp.log(s_sc[...])
        per_row = lse - x0_sc[...]                           # CE with label 0
        if mask_rows:
            row_ids = i * tb + jax.lax.broadcasted_iota(jnp.int32, (tb, 1), 0)
            per_row = jnp.where(row_ids < bsz, per_row, 0.0)
        partial = jnp.sum(per_row)
        o_ref[...] = jnp.broadcast_to(partial, o_ref.shape).astype(jnp.float32)


_SUBLANE_GRANULE = {4: 8, 2: 16, 1: 32}    # f32/i32, bf16/f16, int8/fp8
_TARGET_BLOCK_BYTES = 8 * 1024 * 1024      # amortize ~0.35 us per-grid-step cost
_MIN_BLOCK_BYTES = 1 * 1024 * 1024         # floor when enforcing grid length
_MIN_BATCH_BLOCKS = 4                      # >= 2 blocks per TensorCore on v7x


def _round_up(a, b):
    return -(-a // b) * b


def _pick_tiles(bsz, k, itemsize):
    sub = _SUBLANE_GRANULE.get(itemsize, 8)
    row_bytes = k * itemsize
    bsz_up = _round_up(max(bsz, 1), sub)

    if sub * row_bytes <= _TARGET_BLOCK_BYTES:
        # Full-K rows fit comfortably: tile the batch axis only.
        tk = k
        tb = max(sub, (_TARGET_BLOCK_BYTES // row_bytes) // sub * sub)
        tb = min(tb, bsz_up)
        # Grid-length floor: keep >= _MIN_BATCH_BLOCKS blocks (megacore split +
        # DMA/compute overlap) while each block stays >= ~1 MiB.
        while -(-bsz // tb) < _MIN_BATCH_BLOCKS:
            tb_half = max(sub, (tb // 2) // sub * sub)
            if tb_half == tb or tb_half * row_bytes < _MIN_BLOCK_BYTES:
                break
            tb = tb_half
    else:
        # Very large K: also tile K (online logsumexp bounds VMEM to tb*tk).
        tb = sub
        tk = max(128, (_TARGET_BLOCK_BYTES // (sub * itemsize)) // 128 * 128)
        tk = min(tk, _round_up(k, 128))
    return int(tb), int(tk)
    # TODO(synk): if the grid floor pushes blocks to ~1-2 MiB, sweep
    # pipeline_mode=pl.Buffered(3) on the input BlockSpec.


def nce_softmax_loss(x):
    """x: [bsz, K] or [bsz, K, 1] logits (any float dtype). Returns scalar f32 loss."""
    if x.ndim == 3:
        x = jnp.squeeze(x, axis=-1)   # torch .squeeze() on the canonical [bsz, K, 1]
    assert x.ndim == 2, "expected logits of shape [bsz, K] (after squeeze)"
    bsz, k = x.shape
    itemsize = jnp.dtype(x.dtype).itemsize

    tb, tk = _pick_tiles(bsz, k, itemsize)
    num_b = -(-bsz // tb)
    num_k = -(-k // tk)

    block_bytes = tb * tk * itemsize
    # Device-aware VMEM budget (v7x only has 64 MiB per TensorCore).
    try:
        vmem_cap = int(pltpu.get_tpu_info().vmem_capacity_bytes)
    except Exception:
        vmem_cap = 64 * 1024 * 1024
    needed = 4 * block_bytes + 3 * tb * 128 * 4 + 256 * 1024
    vmem_limit = int(min(max(needed, 8 * 1024 * 1024), (vmem_cap * 4) // 5))

    kernel = functools.partial(
        _nce_softmax_loss_kernel,
        bsz=bsz, k=k, tb=tb, tk=tk,
        mask_rows=(bsz % tb != 0), mask_cols=(k % tk != 0))

    partials = pl.pallas_call(
        kernel,
        out_shape=jax.ShapeDtypeStruct((num_b, 8, 128), jnp.float32),
        grid_spec=pltpu.PrefetchScalarGridSpec(
            num_scalar_prefetch=0,
            grid=(num_b, num_k),
            in_specs=[pl.BlockSpec((tb, tk), lambda i, j: (i, j))],
            out_specs=pl.BlockSpec((1, 8, 128), lambda i, j: (i, 0, 0)),
            scratch_shapes=[pltpu.VMEM((tb, 1), jnp.float32),   # running max
                            pltpu.VMEM((tb, 1), jnp.float32),   # running exp-sum
                            pltpu.VMEM((tb, 1), jnp.float32)],  # x[:, 0]
        ),
        compiler_params=pltpu.CompilerParams(
            dimension_semantics=("parallel", "arbitrary"),
            vmem_limit_bytes=vmem_limit,
        ),
    )(x)   # native dtype: no wrapper up-cast (halves HBM traffic for bf16)

    # Tiny final reduction in plain JAX.
    return jnp.sum(partials[:, 0, 0]) / jnp.float32(bsz)


if __name__ == "__main__":
    key = jax.random.PRNGKey(0)

    # Typical NCE head output shape: [bsz, K, 1].
    bsz, K = 8, 128
    x = jax.random.normal(key, (bsz, K, 1), dtype=jnp.float32)

    loss = nce_softmax_loss(x)
    jax.block_until_ready(loss)

    x2 = jnp.squeeze(x, axis=-1)
    ref = jnp.mean(jax.nn.logsumexp(x2, axis=-1) - x2[:, 0])
    assert jnp.allclose(loss, ref, rtol=1e-5, atol=1e-5), (loss, ref)

    # Extra check: bf16 input with a ragged batch (exercises row masking).
    x_b = jax.random.normal(jax.random.PRNGKey(1), (13, 300, 1),
                            dtype=jnp.bfloat16)
    loss_b = nce_softmax_loss(x_b)
    jax.block_until_ready(loss_b)
    x_b2 = jnp.squeeze(x_b, axis=-1).astype(jnp.float32)
    ref_b = jnp.mean(jax.nn.logsumexp(x_b2, axis=-1) - x_b2[:, 0])
    assert jnp.allclose(loss_b, ref_b, rtol=1e-4, atol=1e-4), (loss_b, ref_b)

    print("KERNEL_OK")
</pallas_src>

<mosaic_0001>
module attributes {stable_mosaic.version = 11 : i64} {
  func.func @_nce_softmax_loss_kernel(%arg0: i32, %arg1: i32, %arg2: memref<8x128xf32, #tpu.memory_space<vmem>>, %arg3: memref<1x8x128xf32, #tpu.memory_space<vmem>>, %arg4: memref<8x1xf32, #tpu.memory_space<vmem>>, %arg5: memref<8x1xf32, #tpu.memory_space<vmem>>, %arg6: memref<8x1xf32, #tpu.memory_space<vmem>>) attributes {dimension_semantics = [#tpu.dimension_semantics<parallel>, #tpu.dimension_semantics<arbitrary>], iteration_bounds = array<i64: 1, 1>, scalar_prefetch = 0 : i64, scratch_operands = 3 : i64, tpu.core_type = #tpu.core_type<tc>, window_params = [{transform_indices = @transform_0, window_bounds = array<i64: 8, 128>}, {transform_indices = @transform_1, window_bounds = array<i64: 1, 8, 128>}]} {
    %c0 = arith.constant 0 : index
    %c0_0 = arith.constant 0 : index
    %0 = vector.load %arg2[%c0, %c0_0] : memref<8x128xf32, #tpu.memory_space<vmem>>, vector<8x128xf32>
    %c0_i32 = arith.constant 0 : i32
    %1 = arith.cmpi eq, %arg1, %c0_i32 : i32
    %2 = arith.extui %1 : i1 to i32
    %c0_i32_1 = arith.constant 0 : i32
    %3 = arith.cmpi ne, %2, %c0_i32_1 : i32
    scf.if %3 {
      %cst_13 = arith.constant 0xFF800000 : f32
      %23 = vector.broadcast %cst_13 : f32 to vector<8x1xf32>
      %c0_14 = arith.constant 0 : index
      %c0_15 = arith.constant 0 : index
      %24 = vector.load %arg4[%c0_14, %c0_15] : memref<8x1xf32, #tpu.memory_space<vmem>>, vector<8x1xf32>
      tpu.vector_store %arg4[%c0_14, %c0_15], %23 {strides = array<i32>} : memref<8x1xf32, #tpu.memory_space<vmem>>, vector<8x1xf32>,
      %cst_16 = arith.constant 0.000000e+00 : f32
      %25 = vector.broadcast %cst_16 : f32 to vector<8x1xf32>
      %c0_17 = arith.constant 0 : index
      %c0_18 = arith.constant 0 : index
      %26 = vector.load %arg5[%c0_17, %c0_18] : memref<8x1xf32, #tpu.memory_space<vmem>>, vector<8x1xf32>
      tpu.vector_store %arg5[%c0_17, %c0_18], %25 {strides = array<i32>} : memref<8x1xf32, #tpu.memory_space<vmem>>, vector<8x1xf32>,
      %27 = vector.extract_strided_slice %0 {offsets = [0, 0], sizes = [8, 1], strides = [1, 1]} : vector<8x128xf32> to vector<8x1xf32>
      %c0_19 = arith.constant 0 : index
      %c0_20 = arith.constant 0 : index
      %28 = vector.load %arg6[%c0_19, %c0_20] : memref<8x1xf32, #tpu.memory_space<vmem>>, vector<8x1xf32>
      tpu.vector_store %arg6[%c0_19, %c0_20], %27 {strides = array<i32>} : memref<8x1xf32, #tpu.memory_space<vmem>>, vector<8x1xf32>,
    } else {
    }
    %c0_2 = arith.constant 0 : index
    %c0_3 = arith.constant 0 : index
    %4 = vector.load %arg4[%c0_2, %c0_3] : memref<8x1xf32, #tpu.memory_space<vmem>>, vector<8x1xf32>
    %cst = arith.constant dense<0xFF800000> : vector<8xf32>
    %5 = vector.multi_reduction <maximumf>, %0, %cst [1] : vector<8x128xf32> to vector<8xf32>
    %6 = vector.shape_cast %5 : vector<8xf32> to vector<8x1xf32>
    %7 = arith.maximumf %4, %6 : vector<8x1xf32>
    %c0_4 = arith.constant 0 : index
    %c0_5 = arith.constant 0 : index
    %8 = vector.load %arg5[%c0_4, %c0_5] : memref<8x1xf32, #tpu.memory_space<vmem>>, vector<8x1xf32>
    %9 = arith.subf %4, %7 : vector<8x1xf32>
    %10 = math.exp %9 : vector<8x1xf32>
    %11 = arith.mulf %8, %10 : vector<8x1xf32>
    %12 = vector.broadcast %7 : vector<8x1xf32> to vector<8x128xf32>
    %13 = arith.subf %0, %12 : vector<8x128xf32>
    %14 = math.exp %13 : vector<8x128xf32>
    %cst_6 = arith.constant dense<0.000000e+00> : vector<8xf32>
    %15 = vector.multi_reduction <add>, %14, %cst_6 [1] : vector<8x128xf32> to vector<8xf32>
    %16 = vector.shape_cast %15 : vector<8xf32> to vector<8x1xf32>
    %17 = arith.addf %11, %16 : vector<8x1xf32>
    %c0_7 = arith.constant 0 : index
    %c0_8 = arith.constant 0 : index
    %18 = vector.load %arg5[%c0_7, %c0_8] : memref<8x1xf32, #tpu.memory_space<vmem>>, vector<8x1xf32>
    tpu.vector_store %arg5[%c0_7, %c0_8], %17 {strides = array<i32>} : memref<8x1xf32, #tpu.memory_space<vmem>>, vector<8x1xf32>,
    %c0_9 = arith.constant 0 : index
    %c0_10 = arith.constant 0 : index
    %19 = vector.load %arg4[%c0_9, %c0_10] : memref<8x1xf32, #tpu.memory_space<vmem>>, vector<8x1xf32>
    tpu.vector_store %arg4[%c0_9, %c0_10], %7 {strides = array<i32>} : memref<8x1xf32, #tpu.memory_space<vmem>>, vector<8x1xf32>,
    %c0_i32_11 = arith.constant 0 : i32
    %20 = arith.cmpi eq, %arg1, %c0_i32_11 : i32
    %21 = arith.extui %20 : i1 to i32
    %c0_i32_12 = arith.constant 0 : i32
    %22 = arith.cmpi ne, %21, %c0_i32_12 : i32
    scf.if %22 {
      %c0_13 = arith.constant 0 : index
      %c0_14 = arith.constant 0 : index
      %23 = vector.load %arg4[%c0_13, %c0_14] : memref<8x1xf32, #tpu.memory_space<vmem>>, vector<8x1xf32>
      %c0_15 = arith.constant 0 : index
      %c0_16 = arith.constant 0 : index
      %24 = vector.load %arg5[%c0_15, %c0_16] : memref<8x1xf32, #tpu.memory_space<vmem>>, vector<8x1xf32>
      %25 = math.log %24 : vector<8x1xf32>
      %26 = arith.addf %23, %25 : vector<8x1xf32>
      %c0_17 = arith.constant 0 : index
      %c0_18 = arith.constant 0 : index
      %27 = vector.load %arg6[%c0_17, %c0_18] : memref<8x1xf32, #tpu.memory_space<vmem>>, vector<8x1xf32>
      %28 = arith.subf %26, %27 : vector<8x1xf32>
      %29 = vector.shape_cast %28 : vector<8x1xf32> to vector<1x8x1xf32>
      %cst_19 = arith.constant dense<0.000000e+00> : vector<1xf32>
      %30 = vector.multi_reduction <add>, %29, %cst_19 [1, 2] : vector<1x8x1xf32> to vector<1xf32>
      %31 = vector.shape_cast %30 : vector<1xf32> to vector<1x1x1xf32>
      %32 = vector.extract %31[0, 0, 0] : f32 from vector<1x1x1xf32>
      %33 = vector.broadcast %32 : f32 to vector<1x8x128xf32>
      %c0_20 = arith.constant 0 : index
      %c0_21 = arith.constant 0 : index
      %c0_22 = arith.constant 0 : index
      %34 = vector.load %arg3[%c0_20, %c0_21, %c0_22] : memref<1x8x128xf32, #tpu.memory_space<vmem>>, vector<1x8x128xf32>
      tpu.vector_store %arg3[%c0_20, %c0_21, %c0_22], %33 {strides = array<i32>} : memref<1x8x128xf32, #tpu.memory_space<vmem>>, vector<1x8x128xf32>,
    } else {
    }
    return
  }
  func.func @transform_0(%arg0: i32, %arg1: i32) -> (i32, i32) {
    %c0_i32 = arith.constant 0 : i32
    return %arg0, %arg1 : i32, i32
  }
  func.func @transform_1(%arg0: i32, %arg1: i32) -> (i32, i32, i32) {
    %c0_i32 = arith.constant 0 : i32
    %c0_i32_0 = arith.constant 0 : i32
    %c0_i32_1 = arith.constant 0 : i32
    return %arg0, %c0_i32, %c0_i32_0 : i32, i32, i32
  }
}

</mosaic_0001>

<llo_original>
// kernel: tpu_custom_call.1
$region0: #{tpu_custom_call.1}
  #allocation0 [shape = 'u32[]', space=smem, size = 0x4, offset = 0x4, fixed_abs, tag = 'smem constant byte address 0x4 - core index']
  #allocation1 [shape = 'u32[72,128]{1,0:T(1,128)}', space=vmem, size = 0x9000, scoped, tag = 'internal scratch']
  #allocation2 [shape = 'f32[8,1]{1,0:T(8,128)}', space=vmem, size = 0x1000, scoped, tag = 'scratch operand']
  #allocation3 [shape = 'f32[8,1]{1,0:T(8,128)}', space=vmem, size = 0x1000, scoped, tag = 'scratch operand']
  #allocation4 [shape = 'f32[8,1]{1,0:T(8,128)}', space=vmem, size = 0x1000, scoped, tag = 'scratch operand']
  %s0 = inlined_call_operand.hbm [shape: f32[8,128], index: 0, kind: input, shape index: {}]
  %s1 = inlined_call_operand.hbm [shape: f32[1,8,128], index: 1, kind: output, shape index: {}]
  %s2 = sld [smem:[#allocation0]]
  $region26: #{tpu_custom_call.1} parent=0
    _
  %s4 = ssub.s32 1, %s2
  %s5 = scalar_select 0, %s4, %s2
  $region1: #{tpu_custom_call.1} parent=0
    #allocation5 [shape = 'u8[4096]{0}', space=vmem, size = 0x1000, scoped, tag = 'input window, operand 0, single buffered']
    #allocation6 [shape = 's32[1]{0}', space=sflag, size = 0x4, scoped, tag = 'scoped memory for tpu_custom_call.1']
    #allocation7 [shape = 's32[1]{0}', space=sflag, size = 0x4, scoped, tag = 'scoped memory for tpu_custom_call.1']
    #allocation8 [shape = 'u8[4096]{0}', space=vmem, size = 0x1000, scoped, tag = 'output window, operand 0, single buffered']
    %6 = vsyncpa [#allocation6], 0
    %7 = vsyncpa [#allocation7], 0
    // Predicated region
    $region2: #{tpu_custom_call.1} parent=1 // pred_check
      _
    $region3: #{tpu_custom_call.1} parent=1 // pred_check_branch
      %9 = sbr.rel (0) target = $region5
    $region4: #{tpu_custom_call.1} parent=1 // pred_region
      %11 = vsyncadd [#allocation6], 0
      %s13 = sshll.u32 %s0, 4
      %s14 = int_to_ptr.hbm [resolvable:$true] %s13
      %s15 = sshll.u32 [#allocation5], 4
      %s16 = int_to_ptr.vmem [resolvable:$true] %s15
      %18 = dma.hbm_to_vmem [thread:$0]  %s14, 128, %s16, [#allocation6]
    $region5: #{tpu_custom_call.1} parent=1 // pred_fallthru
      _
    // Predicated region
    $region6: #{tpu_custom_call.1} parent=1 // pred_check
      _
    $region7: #{tpu_custom_call.1} parent=1 // pred_check_branch
      %20 = sbr.rel (0) target = $region9
    $region8: #{tpu_custom_call.1} parent=1 // pred_region
      %22 = dma.done [#allocation6], 128
    $region9: #{tpu_custom_call.1} parent=1 // pred_fallthru
      _
    %v23 = vld [vmem:[#allocation5] sm:$0xff]
    %p24 = scmp.eq.s32.totalorder 0, 0
    // Predicated region
    $region10: #{tpu_custom_call.1} parent=1 // pred_check
      %p25 = pneg %p24
    $region11: #{tpu_custom_call.1} parent=1 // pred_check_branch
      %27 = sbr.rel (%p25) target = $region13
    $region12: #{tpu_custom_call.1} parent=1 // pred_region
      %vm28 = vcmask 7168
      %29 = vst.msk [vmem:[#allocation2] sm:$0xff] %vm28, -inf
      %30 = vst.msk [vmem:[#allocation3] sm:$0xff] %vm28, 0.0
      %31 = vst.msk [vmem:[#allocation4] sm:$0xff] %vm28, %v23
    $region13: #{tpu_custom_call.1} parent=1 // pred_fallthru
      _
    %v32 = vld [vmem:[#allocation2] sm:$0xff]
    %33 = vmax.xlane.f32.xlu0 %v23
    %v34 = vpop.xlane.xlu0 %33
    %v35 = vmax.f32 %v32, %v34
    %v36 = vld [vmem:[#allocation3] sm:$0xff]
    %v37 = vsub.f32 %v32, %v35
    %v38 = vmul.f32 %v37, 1.442695
    %v39 = vpow.pop %v38
    %v40 = vmul.f32 %v36, %v39
    %42 = vset.pattern.permute.xlu0 0
    %43 = vperm.xlu0 %42, %v35
    %v44 = vpop.permute.xlu0 %43
    %v46 = vsub.f32 %v23, %v44
    %v47 = vmul.f32 %v46, 1.442695
    %v48 = vpow.pop %v47
    %49 = vadd.xlane.f32.xlu0 %v48
    %v50 = vpop.xlane.xlu0 %49
    %v51 = vadd.f32 %v40, %v50
    %vm52 = vcmask 7168
    %53 = vst.msk [vmem:[#allocation3] sm:$0xff] %vm52, %v51
    %54 = vst.msk [vmem:[#allocation2] sm:$0xff] %vm52, %v35
    // Predicated region
    $region14: #{tpu_custom_call.1} parent=1 // pred_check
      %p55 = pneg %p24
    $region15: #{tpu_custom_call.1} parent=1 // pred_check_branch
      %57 = sbr.rel (%p55) target = $region17
    $region16: #{tpu_custom_call.1} parent=1 // pred_region
      %v58 = vld [vmem:[#allocation2] sm:$0xff]
      %v59 = vld [vmem:[#allocation3] sm:$0xff]
      %v60 = vlog2.pop %v59
      %v61 = vmul.f32 %v60, 0.6931472
      %v62 = vadd.f32 %v58, %v61
      %v63 = vld [vmem:[#allocation4] sm:$0xff]
      %v64 = vsub.f32 %v62, %v63
      %v65 = vsel %vm52, %v64, 0.0
      %66 = vadd.xlane.f32.xlu0 %v65
      %v67 = vpop.xlane.xlu0 %66
      %v68 = vrot.slane %v67, 4
      %v69 = vadd.f32 %v67, %v68
      %v70 = vrot.slane %v69, 2
      %v71 = vadd.f32 %v69, %v70
      %v72 = vrot.slane %v71, 1
      %v73 = vadd.f32 %v71, %v72
      %s74 = vtos %v73
      %v75 = vstv %s74
      %76 = vst [vmem:[#allocation8] sm:$0xff] %v75
    $region17: #{tpu_custom_call.1} parent=1 // pred_fallthru
      _
    // Predicated region
    $region18: #{tpu_custom_call.1} parent=1 // pred_check
      _
    $region19: #{tpu_custom_call.1} parent=1 // pred_check_branch
      %78 = sbr.rel (0) target = $region21
    $region20: #{tpu_custom_call.1} parent=1 // pred_region
      %80 = vsyncadd [#allocation7], 0
      %s82 = sshll.u32 [#allocation8], 4
      %s83 = int_to_ptr.vmem [resolvable:$true] %s82
      %s84 = sshll.u32 %s1, 4
      %s85 = int_to_ptr.hbm [resolvable:$true] %s84
      %87 = dma.vmem_to_hbm [thread:$0]  %s83, 128, %s85, [#allocation7]
    $region21: #{tpu_custom_call.1} parent=1 // pred_fallthru
      _
    // Predicated region
    $region22: #{tpu_custom_call.1} parent=1 // pred_check
      _
    $region23: #{tpu_custom_call.1} parent=1 // pred_check_branch
      %89 = sbr.rel (0) target = $region25
    $region24: #{tpu_custom_call.1} parent=1 // pred_region
      %91 = dma.done [#allocation7], 128
    $region25: #{tpu_custom_call.1} parent=1 // pred_fallthru
      _
    %92 = vsyncpa [#allocation6], 1
    %93 = vsyncpa [#allocation7], 1

</llo_original>
